<compile_context>
chip_gen: v7x
topology: tpu7x:2x2x1
jax: 0.10.0
libtpu: 0.0.40
codegen_flags: <defaults>
</compile_context>

<pallas_src>
import functools

import jax
import jax.numpy as jnp
from jax.experimental import pallas as pl
from jax.experimental.pallas import tpu as pltpu


def _divergence_kernel(x_ref, eps_ref, w1_ref, b1_ref, w2_ref, b2_ref,
                       fx_ref, div_ref):
    """One batch tile: fused MLP over [x ; x+eps] and the divergence dot."""
    x = x_ref[...]            # (bm, D)
    eps = eps_ref[...]        # (bm, D)
    bm = x.shape[0]

    w1 = w1_ref[...]          # (D, H)   (stored as in->out, i.e. PyTorch W1^T)
    b1 = b1_ref[...]          # (1, H)
    w2 = w2_ref[...]          # (H, D)
    b2 = b2_ref[...]          # (1, D)

    # Stack the two MLP passes along the batch (sublane) axis: one matmul
    # chain instead of two, and bias broadcasts / softplus happen once.
    stacked = jnp.concatenate([x, x + eps], axis=0)          # (2*bm, D)

    h = jnp.dot(stacked, w1, preferred_element_type=jnp.float32) + b1

    # nn.Softplus(beta=20) with PyTorch's default threshold=20:
    #   softplus(x) = x                          if beta*x > 20
    #               = log1p(exp(beta*x)) / beta  otherwise
    beta = jnp.float32(20.0)
    inv_beta = jnp.float32(1.0 / 20.0)           # multiply, not divide (EUP)
    bh = beta * h
    soft = jnp.log1p(jnp.exp(jnp.minimum(bh, 20.0))) * inv_beta
    h = jnp.where(bh > 20.0, h, soft)

    y = jnp.dot(h, w2, preferred_element_type=jnp.float32) + b2   # (2*bm, D)

    fx = y[:bm]                                  # (bm, D)
    eps_fx = y[bm:]                              # (bm, D)
    # torch.bmm(eps.unsqueeze(-2), eps_fx.unsqueeze(-1)).squeeze(-1) -> (bm, 1)
    div_fx = jnp.sum(eps * eps_fx, axis=-1, keepdims=True)

    fx_ref[...] = fx.astype(fx_ref.dtype)
    div_ref[...] = (-div_fx).astype(div_ref.dtype)


@functools.partial(jax.jit, static_argnames=("bm",))
def temporal_network_divergence(t, x, w1, b1, w2, b2, eps, *, bm=None):
    """Forward pass of TemporalNetworkDivergence (time_dep=False).

    Args:
      t:   scalar time (unused when time_dep=False, kept for API parity).
      x:   [B, input_dim + 1] float32.
      w1:  [input_dim, hidden] (= PyTorch weight.T), b1: [hidden].
      w2:  [hidden, input_dim] (= PyTorch weight.T), b2: [input_dim].
      eps: [B, input_dim] standard-normal noise (torch.randn_like equivalent).
      bm:  batch tile; default picks the largest tile compatible with a
           2-step parallel grid (one tile per TensorCore on v7x).
    Returns:
      [B, input_dim + 1] = concat([fx, -div_fx], -1).
    """
    del t  # time_dep=False
    B = x.shape[0]
    D = x.shape[1] - 1
    H = w1.shape[1]

    if bm is None:
        # Two parallel grid steps so a 2-TC chip (v7x) runs one tile per core;
        # the extra grid step costs ~0.35us on 1-TC chips (negligible).
        # Keep bm a multiple of 8 (sublane alignment for the stacked split).
        if B % 16 == 0:
            bm = B // 2
        else:
            bm = B
    assert B % bm == 0, "batch must be a multiple of the batch tile"

    x_in = x[:, :-1]
    b1_2d = b1.reshape(1, H)
    b2_2d = b2.reshape(1, D)

    grid = (B // bm,)

    cost = pl.CostEstimate(
        flops=8 * B * D * H,                     # two matmuls x two fused passes
        transcendentals=4 * B * H,               # exp + log1p, both passes
        bytes_accessed=(2 * B * D                # x_in, eps in
                        + B * D + B              # fx, -div out
                        + D * H + H + H * D + D  # weights / biases
                        ) * 4,
    )

    fx, neg_div = pl.pallas_call(
        _divergence_kernel,
        out_shape=(
            jax.ShapeDtypeStruct((B, D), x.dtype),
            jax.ShapeDtypeStruct((B, 1), x.dtype),
        ),
        grid_spec=pltpu.PrefetchScalarGridSpec(
            num_scalar_prefetch=0,
            grid=grid,
            in_specs=[
                pl.BlockSpec((bm, D), lambda i: (i, 0)),      # x_in tile
                pl.BlockSpec((bm, D), lambda i: (i, 0)),      # eps tile
                pl.BlockSpec((D, H), lambda i: (0, 0)),       # W1 (resident)
                pl.BlockSpec((1, H), lambda i: (0, 0)),       # b1
                pl.BlockSpec((H, D), lambda i: (0, 0)),       # W2 (resident)
                pl.BlockSpec((1, D), lambda i: (0, 0)),       # b2
            ],
            out_specs=[
                pl.BlockSpec((bm, D), lambda i: (i, 0)),      # fx
                pl.BlockSpec((bm, 1), lambda i: (i, 0)),      # -div_fx
            ],
        ),
        compiler_params=pltpu.CompilerParams(
            dimension_semantics=("parallel",),
        ),
        cost_estimate=cost,
    )(x_in, eps, w1, b1_2d, w2, b2_2d)

    # Single cheap lane-axis concat in the wrapper (outside the kernel).
    return jnp.concatenate([fx, neg_div], axis=-1)


def init_params(key, input_dim, hidden_dim):
    """Deterministic init mirroring the PyTorch module: W ~ N(0, 0.1), b = 0."""
    k1, k2 = jax.random.split(key)
    w1 = 0.1 * jax.random.normal(k1, (input_dim, hidden_dim), dtype=jnp.float32)
    b1 = jnp.zeros((hidden_dim,), dtype=jnp.float32)
    w2 = 0.1 * jax.random.normal(k2, (hidden_dim, input_dim), dtype=jnp.float32)
    b2 = jnp.zeros((input_dim,), dtype=jnp.float32)
    return w1, b1, w2, b2


def _reference(t, x, w1, b1, w2, b2, eps):
    """Pure-JAX reference for sanity checking the kernel."""
    del t
    x_in = x[:, :-1]
    beta = 20.0

    def softplus20(h):
        bh = beta * h
        return jnp.where(bh > 20.0, h,
                         jnp.log1p(jnp.exp(jnp.minimum(bh, 20.0))) / beta)

    def mlp(inp):
        return softplus20(inp @ w1 + b1) @ w2 + b2

    fx = mlp(x_in)
    eps_fx = mlp(x_in + eps)
    div_fx = jnp.sum(eps * eps_fx, axis=-1, keepdims=True)
    return jnp.concatenate([fx, -div_fx], axis=-1)


if __name__ == "__main__":
    key = jax.random.PRNGKey(0)
    k_param, k_x, k_eps = jax.random.split(key, 3)

    B, input_dim, hidden_dim = 128, 16, 32

    w1, b1, w2, b2 = init_params(k_param, input_dim, hidden_dim)
    # Forward inputs: t scalar, x of shape [B, input_dim + 1]
    t = jnp.float32(0.5)
    x = jax.random.normal(k_x, (B, input_dim + 1), dtype=jnp.float32)
    eps = jax.random.normal(k_eps, (B, input_dim), dtype=jnp.float32)

    out = temporal_network_divergence(t, x, w1, b1, w2, b2, eps)
    out = jax.block_until_ready(out)

    ref = _reference(t, x, w1, b1, w2, b2, eps)
    assert out.shape == (B, input_dim + 1), out.shape
    assert jnp.allclose(out, ref, atol=1e-5, rtol=1e-5), "mismatch vs reference"

    print("KERNEL_OK")
</pallas_src>

<mosaic_0001>
module attributes {stable_mosaic.version = 11 : i64} {
  func.func @_divergence_kernel(%arg0: i32, %arg1: memref<64x16xf32, #tpu.memory_space<vmem>>, %arg2: memref<64x16xf32, #tpu.memory_space<vmem>>, %arg3: memref<16x32xf32, #tpu.memory_space<vmem>>, %arg4: memref<1x32xf32, #tpu.memory_space<vmem>>, %arg5: memref<32x16xf32, #tpu.memory_space<vmem>>, %arg6: memref<1x16xf32, #tpu.memory_space<vmem>>, %arg7: memref<64x16xf32, #tpu.memory_space<vmem>>, %arg8: memref<64x1xf32, #tpu.memory_space<vmem>>) attributes {dimension_semantics = [#tpu.dimension_semantics<parallel>], iteration_bounds = array<i64: 2>, scalar_prefetch = 0 : i64, scratch_operands = 0 : i64, tpu.core_type = #tpu.core_type<tc>, window_params = [{transform_indices = @transform_0, window_bounds = array<i64: 64, 16>}, {transform_indices = @transform_1, window_bounds = array<i64: 64, 16>}, {pipeline_mode = #tpu.pipeline_mode<synchronous>, transform_indices = @transform_2, window_bounds = array<i64: 16, 32>}, {pipeline_mode = #tpu.pipeline_mode<synchronous>, transform_indices = @transform_3, window_bounds = array<i64: 1, 32>}, {pipeline_mode = #tpu.pipeline_mode<synchronous>, transform_indices = @transform_4, window_bounds = array<i64: 32, 16>}, {pipeline_mode = #tpu.pipeline_mode<synchronous>, transform_indices = @transform_5, window_bounds = array<i64: 1, 16>}, {transform_indices = @transform_6, window_bounds = array<i64: 64, 16>}, {transform_indices = @transform_7, window_bounds = array<i64: 64, 1>}]} {
    %c0 = arith.constant 0 : index
    %c0_0 = arith.constant 0 : index
    %0 = vector.load %arg1[%c0, %c0_0] : memref<64x16xf32, #tpu.memory_space<vmem>>, vector<64x16xf32>
    %c0_1 = arith.constant 0 : index
    %c0_2 = arith.constant 0 : index
    %1 = vector.load %arg2[%c0_1, %c0_2] : memref<64x16xf32, #tpu.memory_space<vmem>>, vector<64x16xf32>
    %c0_3 = arith.constant 0 : index
    %c0_4 = arith.constant 0 : index
    %2 = vector.load %arg3[%c0_3, %c0_4] : memref<16x32xf32, #tpu.memory_space<vmem>>, vector<16x32xf32>
    %c0_5 = arith.constant 0 : index
    %c0_6 = arith.constant 0 : index
    %3 = vector.load %arg4[%c0_5, %c0_6] : memref<1x32xf32, #tpu.memory_space<vmem>>, vector<1x32xf32>
    %c0_7 = arith.constant 0 : index
    %c0_8 = arith.constant 0 : index
    %4 = vector.load %arg5[%c0_7, %c0_8] : memref<32x16xf32, #tpu.memory_space<vmem>>, vector<32x16xf32>
    %c0_9 = arith.constant 0 : index
    %c0_10 = arith.constant 0 : index
    %5 = vector.load %arg6[%c0_9, %c0_10] : memref<1x16xf32, #tpu.memory_space<vmem>>, vector<1x16xf32>
    %6 = arith.addf %0, %1 : vector<64x16xf32>
    %7 = tpu.concatenate %0, %6 in 0 : vector<64x16xf32>, vector<64x16xf32> -> vector<128x16xf32>
    %cst = arith.constant dense<0.000000e+00> : vector<128x32xf32>
    %8 = tpu.matmul %7, %2, %cst {dimension_numbers = #tpu.dot_dimension_numbers<[1], [0], [0], [1], [0, 0, 1, 1], [], []>} : vector<128x16xf32>, vector<16x32xf32>, vector<128x32xf32> -> vector<128x32xf32>
    %9 = vector.broadcast %3 : vector<1x32xf32> to vector<128x32xf32>
    %10 = arith.addf %8, %9 : vector<128x32xf32>
    %cst_11 = arith.constant 2.000000e+01 : f32
    %11 = vector.broadcast %cst_11 : f32 to vector<128x32xf32>
    %12 = arith.mulf %11, %10 : vector<128x32xf32>
    %cst_12 = arith.constant 2.000000e+01 : f32
    %13 = vector.broadcast %cst_12 : f32 to vector<128x32xf32>
    %14 = arith.minimumf %12, %13 : vector<128x32xf32>
    %15 = math.exp %14 : vector<128x32xf32>
    %16 = math.log1p %15 : vector<128x32xf32>
    %cst_13 = arith.constant 5.000000e-02 : f32
    %17 = vector.broadcast %cst_13 : f32 to vector<128x32xf32>
    %18 = arith.mulf %16, %17 : vector<128x32xf32>
    %cst_14 = arith.constant 2.000000e+01 : f32
    %19 = vector.broadcast %cst_14 : f32 to vector<128x32xf32>
    %20 = arith.cmpf ogt, %12, %19 : vector<128x32xf32>
    %21 = arith.select %20, %10, %18 : vector<128x32xi1>, vector<128x32xf32>
    %cst_15 = arith.constant dense<0.000000e+00> : vector<128x16xf32>
    %22 = tpu.matmul %21, %4, %cst_15 {dimension_numbers = #tpu.dot_dimension_numbers<[1], [0], [0], [1], [0, 0, 1, 1], [], []>} : vector<128x32xf32>, vector<32x16xf32>, vector<128x16xf32> -> vector<128x16xf32>
    %23 = vector.broadcast %5 : vector<1x16xf32> to vector<128x16xf32>
    %24 = arith.addf %22, %23 : vector<128x16xf32>
    %25 = vector.extract_strided_slice %24 {offsets = [0, 0], sizes = [64, 16], strides = [1, 1]} : vector<128x16xf32> to vector<64x16xf32>
    %26 = vector.extract_strided_slice %24 {offsets = [64, 0], sizes = [64, 16], strides = [1, 1]} : vector<128x16xf32> to vector<64x16xf32>
    %27 = arith.mulf %1, %26 : vector<64x16xf32>
    %cst_16 = arith.constant dense<0.000000e+00> : vector<64xf32>
    %28 = vector.multi_reduction <add>, %27, %cst_16 [1] : vector<64x16xf32> to vector<64xf32>
    %29 = vector.shape_cast %28 : vector<64xf32> to vector<64x1xf32>
    %c0_17 = arith.constant 0 : index
    %c0_18 = arith.constant 0 : index
    %30 = vector.load %arg7[%c0_17, %c0_18] : memref<64x16xf32, #tpu.memory_space<vmem>>, vector<64x16xf32>
    tpu.vector_store %arg7[%c0_17, %c0_18], %25 {strides = array<i32>} : memref<64x16xf32, #tpu.memory_space<vmem>>, vector<64x16xf32>,
    %cst_19 = arith.constant 0.000000e+00 : f32
    %31 = vector.broadcast %cst_19 : f32 to vector<64x1xf32>
    %32 = arith.subf %31, %29 : vector<64x1xf32>
    %c0_20 = arith.constant 0 : index
    %c0_21 = arith.constant 0 : index
    %33 = vector.load %arg8[%c0_20, %c0_21] : memref<64x1xf32, #tpu.memory_space<vmem>>, vector<64x1xf32>
    tpu.vector_store %arg8[%c0_20, %c0_21], %32 {strides = array<i32>} : memref<64x1xf32, #tpu.memory_space<vmem>>, vector<64x1xf32>,
    return
  }
  func.func @transform_0(%arg0: i32) -> (i32, i32) {
    %c0_i32 = arith.constant 0 : i32
    %c0_i32_0 = arith.constant 0 : i32
    return %arg0, %c0_i32 : i32, i32
  }
  func.func @transform_1(%arg0: i32) -> (i32, i32) {
    %c0_i32 = arith.constant 0 : i32
    %c0_i32_0 = arith.constant 0 : i32
    return %arg0, %c0_i32 : i32, i32
  }
  func.func @transform_2(%arg0: i32) -> (i32, i32) {
    %c0_i32 = arith.constant 0 : i32
    %c0_i32_0 = arith.constant 0 : i32
    %c0_i32_1 = arith.constant 0 : i32
    return %c0_i32, %c0_i32_0 : i32, i32
  }
  func.func @transform_3(%arg0: i32) -> (i32, i32) {
    %c0_i32 = arith.constant 0 : i32
    %c0_i32_0 = arith.constant 0 : i32
    %c0_i32_1 = arith.constant 0 : i32
    return %c0_i32, %c0_i32_0 : i32, i32
  }
  func.func @transform_4(%arg0: i32) -> (i32, i32) {
    %c0_i32 = arith.constant 0 : i32
    %c0_i32_0 = arith.constant 0 : i32
    %c0_i32_1 = arith.constant 0 : i32
    return %c0_i32, %c0_i32_0 : i32, i32
  }
  func.func @transform_5(%arg0: i32) -> (i32, i32) {
    %c0_i32 = arith.constant 0 : i32
    %c0_i32_0 = arith.constant 0 : i32
    %c0_i32_1 = arith.constant 0 : i32
    return %c0_i32, %c0_i32_0 : i32, i32
  }
  func.func @transform_6(%arg0: i32) -> (i32, i32) {
    %c0_i32 = arith.constant 0 : i32
    %c0_i32_0 = arith.constant 0 : i32
    return %arg0, %c0_i32 : i32, i32
  }
  func.func @transform_7(%arg0: i32) -> (i32, i32) {
    %c0_i32 = arith.constant 0 : i32
    %c0_i32_0 = arith.constant 0 : i32
    return %arg0, %c0_i32 : i32, i32
  }
}

</mosaic_0001>

<llo_original>
// kernel: temporal_network_divergence.1
$region0: #{temporal_network_divergence.1}
  #allocation0 [shape = 'u32[]', space=smem, size = 0x4, offset = 0x4, fixed_abs, tag = 'smem constant byte address 0x4 - core index']
  #allocation1 [shape = 'u32[144,128]{1,0:T(1,128)}', space=vmem, size = 0x12000, scoped, tag = 'internal scratch']
  %s0 = inlined_call_operand.vmem [shape: f32[128,16], index: 0, kind: input, shape index: {}]
  %s1 = inlined_call_operand.vmem [shape: f32[128,16], index: 1, kind: input, shape index: {}]
  %s2 = inlined_call_operand.vmem [shape: f32[16,32], index: 2, kind: input, shape index: {}]
  %s3 = inlined_call_operand.vmem [shape: f32[1,32], index: 3, kind: input, shape index: {}]
  %s4 = inlined_call_operand.vmem [shape: f32[32,16], index: 4, kind: input, shape index: {}]
  %s5 = inlined_call_operand.vmem [shape: f32[1,16], index: 5, kind: input, shape index: {}]
  %s6 = inlined_call_operand.vmem [shape: f32[128,16], index: 6, kind: output, shape index: {0}]
  %s7 = inlined_call_operand.vmem [shape: f32[128,1], index: 7, kind: output, shape index: {1}]
  %8 = xla_tuple %s6, %s7
  %s9 = sld [smem:[#allocation0]]
  $region65: #{temporal_network_divergence.1} parent=0
    _
  %s11 = ssub.s32 1, %s9
  %s12 = scalar_select 0, %s11, %s9
  loop: start=0, step=1, limit=4
  $region2: #{temporal_network_divergence.1} parent=0 // loop_pre_header
    _
  $region3: #{temporal_network_divergence.1} parent=0 // loop_header
    %s14 = sphi 0, %s18
    %p15 = scmp.ge.s32.totalorder %s14, 4
    %s24 = sphi 0, %s26
    %s27 = sphi 0, %s24
    %s28 = sphi 0, %s27
    %s44 = sphi 0, %s28
    %s50 = sphi 0, %s52
    %s53 = sphi 0, %s50
    %s54 = sphi 0, %s53
    %s70 = sphi 0, %s54
    %s74 = sphi 0, %s74
    %s76 = sphi 0, %s74
    %s77 = sphi 0, %s76
    %s91 = sphi 0, %s77
    %s95 = sphi 0, %s95
    %s97 = sphi 0, %s95
    %s98 = sphi 0, %s97
    %s112 = sphi 0, %s98
    %s116 = sphi 0, %s116
    %s118 = sphi 0, %s116
    %s119 = sphi 0, %s118
    %s133 = sphi 0, %s119
    %s137 = sphi 0, %s137
    %s139 = sphi 0, %s137
    %s140 = sphi 0, %s139
    %s154 = sphi 0, %s140
    %s160 = sphi 0, %s162
    %s163 = sphi 0, %s160
    %s164 = sphi 0, %s163
    %s180 = sphi 0, %s164
    %s186 = sphi 0, %s188
    %s189 = sphi 0, %s186
    %s190 = sphi 0, %s189
    %s206 = sphi 0, %s190
  $region4: #{temporal_network_divergence.1} parent=0 // loop_header_branch
    %17 = sbr.rel (%p15) target = $region8
  $region5: #{temporal_network_divergence.1} parent=0 // loop_body
    %s19 = ssub.s32 %s14, 1
    %s20 = ssub.s32 %s14, 2
    %s21 = sadd.s32 %s14, 1
    %s22 = ssub.s32 %s14, %s21
    %p23 = scmp.eq.s32.totalorder %s22, 0
    %s25 = sadd.s32 %s24, 1
    %s26 = scalar_select %p23, %s24, %s25
    %p29 = pneg %p23
    %p30 = scmp.eq.s32.totalorder %s14, 1
    %p31 = por %p29, %p30
    %p32 = scmp.ne.s32.totalorder %s24, %s27
    %p33 = scmp.eq.s32.totalorder %s14, 0
    %p34 = por %p32, %p33
    %p35 = scmp.ne.s32.totalorder %s24, %s27
    %p36 = scmp.eq.s32.totalorder %s19, 1
    %p37 = por %p35, %p36
    %p38 = scmp.ne.s32.totalorder %s27, %s28
    %p39 = scmp.eq.s32.totalorder %s19, 0
    %p40 = por %p38, %p39
    %p41 = scmp.ne.s32.totalorder %s27, %s28
    %p42 = scmp.eq.s32.totalorder %s20, 1
    %p43 = por %p41, %p42
    %p45 = scmp.ne.s32.totalorder %s28, %s44
    %p46 = scmp.eq.s32.totalorder %s20, 0
    %p47 = por %p45, %p46
    %s48 = ssub.s32 %s14, %s21
    %p49 = scmp.eq.s32.totalorder %s48, 0
    %s51 = sadd.s32 %s50, 1
    %s52 = scalar_select %p49, %s50, %s51
    %p55 = pneg %p49
    %p56 = scmp.eq.s32.totalorder %s14, 1
    %p57 = por %p55, %p56
    %p58 = scmp.ne.s32.totalorder %s50, %s53
    %p59 = scmp.eq.s32.totalorder %s14, 0
    %p60 = por %p58, %p59
    %p61 = scmp.ne.s32.totalorder %s50, %s53
    %p62 = scmp.eq.s32.totalorder %s19, 1
    %p63 = por %p61, %p62
    %p64 = scmp.ne.s32.totalorder %s53, %s54
    %p65 = scmp.eq.s32.totalorder %s19, 0
    %p66 = por %p64, %p65
    %p67 = scmp.ne.s32.totalorder %s53, %s54
    %p68 = scmp.eq.s32.totalorder %s20, 1
    %p69 = por %p67, %p68
    %p71 = scmp.ne.s32.totalorder %s54, %s70
    %p72 = scmp.eq.s32.totalorder %s20, 0
    %p73 = por %p71, %p72
    %s75 = sadd.s32 %s74, 1
    %p78 = scmp.eq.s32.totalorder %s14, 1
    %p79 = scmp.ne.s32.totalorder %s74, %s76
    %p80 = scmp.eq.s32.totalorder %s14, 0
    %p81 = por %p79, %p80
    %p82 = scmp.ne.s32.totalorder %s74, %s76
    %p83 = scmp.eq.s32.totalorder %s19, 1
    %p84 = por %p82, %p83
    %p85 = scmp.ne.s32.totalorder %s76, %s77
    %p86 = scmp.eq.s32.totalorder %s19, 0
    %p87 = por %p85, %p86
    %p88 = scmp.ne.s32.totalorder %s76, %s77
    %p89 = scmp.eq.s32.totalorder %s20, 1
    %p90 = por %p88, %p89
    %p92 = scmp.ne.s32.totalorder %s77, %s91
    %p93 = scmp.eq.s32.totalorder %s20, 0
    %p94 = por %p92, %p93
    %s96 = sadd.s32 %s95, 1
    %p99 = scmp.eq.s32.totalorder %s14, 1
    %p100 = scmp.ne.s32.totalorder %s95, %s97
    %p101 = scmp.eq.s32.totalorder %s14, 0
    %p102 = por %p100, %p101
    %p103 = scmp.ne.s32.totalorder %s95, %s97
    %p104 = scmp.eq.s32.totalorder %s19, 1
    %p105 = por %p103, %p104
    %p106 = scmp.ne.s32.totalorder %s97, %s98
    %p107 = scmp.eq.s32.totalorder %s19, 0
    %p108 = por %p106, %p107
    %p109 = scmp.ne.s32.totalorder %s97, %s98
    %p110 = scmp.eq.s32.totalorder %s20, 1
    %p111 = por %p109, %p110
    %p113 = scmp.ne.s32.totalorder %s98, %s112
    %p114 = scmp.eq.s32.totalorder %s20, 0
    %p115 = por %p113, %p114
    %s117 = sadd.s32 %s116, 1
    %p120 = scmp.eq.s32.totalorder %s14, 1
    %p121 = scmp.ne.s32.totalorder %s116, %s118
    %p122 = scmp.eq.s32.totalorder %s14, 0
    %p123 = por %p121, %p122
    %p124 = scmp.ne.s32.totalorder %s116, %s118
    %p125 = scmp.eq.s32.totalorder %s19, 1
    %p126 = por %p124, %p125
    %p127 = scmp.ne.s32.totalorder %s118, %s119
    %p128 = scmp.eq.s32.totalorder %s19, 0
    %p129 = por %p127, %p128
    %p130 = scmp.ne.s32.totalorder %s118, %s119
    %p131 = scmp.eq.s32.totalorder %s20, 1
    %p132 = por %p130, %p131
    %p134 = scmp.ne.s32.totalorder %s119, %s133
    %p135 = scmp.eq.s32.totalorder %s20, 0
    %p136 = por %p134, %p135
    %s138 = sadd.s32 %s137, 1
    %p141 = scmp.eq.s32.totalorder %s14, 1
    %p142 = scmp.ne.s32.totalorder %s137, %s139
    %p143 = scmp.eq.s32.totalorder %s14, 0
    %p144 = por %p142, %p143
    %p145 = scmp.ne.s32.totalorder %s137, %s139
    %p146 = scmp.eq.s32.totalorder %s19, 1
    %p147 = por %p145, %p146
    %p148 = scmp.ne.s32.totalorder %s139, %s140
    %p149 = scmp.eq.s32.totalorder %s19, 0
    %p150 = por %p148, %p149
    %p151 = scmp.ne.s32.totalorder %s139, %s140
    %p152 = scmp.eq.s32.totalorder %s20, 1
    %p153 = por %p151, %p152
    %p155 = scmp.ne.s32.totalorder %s140, %s154
    %p156 = scmp.eq.s32.totalorder %s20, 0
    %p157 = por %p155, %p156
    %s158 = ssub.s32 %s14, %s21
    %p159 = scmp.eq.s32.totalorder %s158, 0
    %s161 = sadd.s32 %s160, 1
    %s162 = scalar_select %p159, %s160, %s161
    %p165 = pneg %p159
    %p166 = scmp.eq.s32.totalorder %s14, 1
    %p167 = por %p165, %p166
    %p168 = scmp.ne.s32.totalorder %s160, %s163
    %p169 = scmp.eq.s32.totalorder %s14, 0
    %p170 = por %p168, %p169
    %p171 = scmp.ne.s32.totalorder %s160, %s163
    %p172 = scmp.eq.s32.totalorder %s19, 1
    %p173 = por %p171, %p172
    %p174 = scmp.ne.s32.totalorder %s163, %s164
    %p175 = scmp.eq.s32.totalorder %s19, 0
    %p176 = por %p174, %p175
    %p177 = scmp.ne.s32.totalorder %s163, %s164
    %p178 = scmp.eq.s32.totalorder %s20, 1
    %p179 = por %p177, %p178
    %p181 = scmp.ne.s32.totalorder %s164, %s180
    %p182 = scmp.eq.s32.totalorder %s20, 0
    %p183 = por %p181, %p182
    %s184 = ssub.s32 %s14, %s21
    %p185 = scmp.eq.s32.totalorder %s184, 0
    %s187 = sadd.s32 %s186, 1
    %s188 = scalar_select %p185, %s186, %s187
    %p191 = pneg %p185
    %p192 = scmp.eq.s32.totalorder %s14, 1
    %p193 = por %p191, %p192
    %p194 = scmp.ne.s32.totalorder %s186, %s189
    %p195 = scmp.eq.s32.totalorder %s14, 0
    %p196 = por %p194, %p195
    %p197 = scmp.ne.s32.totalorder %s186, %s189
    %p198 = scmp.eq.s32.totalorder %s19, 1
    %p199 = por %p197, %p198
    %p200 = scmp.ne.s32.totalorder %s189, %s190
    %p201 = scmp.eq.s32.totalorder %s19, 0
    %p202 = por %p200, %p201
    %p203 = scmp.ne.s32.totalorder %s189, %s190
    %p204 = scmp.eq.s32.totalorder %s20, 1
    %p205 = por %p203, %p204
    %p207 = scmp.ne.s32.totalorder %s190, %s206
    %p208 = scmp.eq.s32.totalorder %s20, 0
    %p209 = por %p207, %p208
    %p210 = scmp.le.s32.totalorder 1, %s14
    %p211 = scmp.lt.s32.totalorder %s14, 3
    %p212 = pnand %p210, %p211
    %p213 = pneg %p212
    // Predicated region
    $region9: #{temporal_network_divergence.1} parent=5 // pred_check
      _
    $region10: #{temporal_network_divergence.1} parent=5 // pred_check_branch
      %215 = sbr.rel (%p212) target = $region12
    $region11: #{temporal_network_divergence.1} parent=5 // pred_region
      %s216 = ssub.s32 %s14, 1
      // Predicated region
      $region13: #{temporal_network_divergence.1} parent=11 // pred_check
        %p217 = pneg %p87
      $region14: #{temporal_network_divergence.1} parent=11 // pred_check_branch
        %219 = sbr.rel (%p217) target = $region16
      $region15: #{temporal_network_divergence.1} parent=11 // pred_region
        _
      $region16: #{temporal_network_divergence.1} parent=11 // pred_fallthru
        _
      // Predicated region
      $region17: #{temporal_network_divergence.1} parent=11 // pred_check
        %p220 = pneg %p108
      $region18: #{temporal_network_divergence.1} parent=11 // pred_check_branch
        %222 = sbr.rel (%p220) target = $region20
      $region19: #{temporal_network_divergence.1} parent=11 // pred_region
        _
      $region20: #{temporal_network_divergence.1} parent=11 // pred_fallthru
        _
      // Predicated region
      $region21: #{temporal_network_divergence.1} parent=11 // pred_check
        %p223 = pneg %p129
      $region22: #{temporal_network_divergence.1} parent=11 // pred_check_branch
        %225 = sbr.rel (%p223) target = $region24
      $region23: #{temporal_network_divergence.1} parent=11 // pred_region
        _
      $region24: #{temporal_network_divergence.1} parent=11 // pred_fallthru
        _
      // Predicated region
      $region25: #{temporal_network_divergence.1} parent=11 // pred_check
        %p226 = pneg %p150
      $region26: #{temporal_network_divergence.1} parent=11 // pred_check_branch
        %228 = sbr.rel (%p226) target = $region28
      $region27: #{temporal_network_divergence.1} parent=11 // pred_region
        _
      $region28: #{temporal_network_divergence.1} parent=11 // pred_fallthru
        _
    $region12: #{temporal_network_divergence.1} parent=5 // pred_fallthru
      _
    %p229 = scmp.lt.s32.totalorder %s14, 2
    // Predicated region
    $region29: #{temporal_network_divergence.1} parent=5 // pred_check
      %p230 = pneg %p229
    $region30: #{temporal_network_divergence.1} parent=5 // pred_check_branch
      %232 = sbr.rel (%p230) target = $region32
    $region31: #{temporal_network_divergence.1} parent=5 // pred_region
      // Predicated region
      $region33: #{temporal_network_divergence.1} parent=31 // pred_check
        %p233 = pneg %p34
      $region34: #{temporal_network_divergence.1} parent=31 // pred_check_branch
        %235 = sbr.rel (%p233) target = $region36
      $region35: #{temporal_network_divergence.1} parent=31 // pred_region
        %s236 = smul.u32 8, %s14
        %p237 = scmp.lt.s32.totalorder %s236, 15
        %s238 = scalar_select %p237, %s236, 15
        %s239 = smul.addr %s238, 8
        %s240 = scalar_lea.vmem %s0, %s239
        %s241 = smul.u32 8, %s14
      $region36: #{temporal_network_divergence.1} parent=31 // pred_fallthru
        _
      // Predicated region
      $region37: #{temporal_network_divergence.1} parent=31 // pred_check
        %p242 = pneg %p60
      $region38: #{temporal_network_divergence.1} parent=31 // pred_check_branch
        %244 = sbr.rel (%p242) target = $region40
      $region39: #{temporal_network_divergence.1} parent=31 // pred_region
        %s245 = smul.u32 8, %s14
        %p246 = scmp.lt.s32.totalorder %s245, 15
        %s247 = scalar_select %p246, %s245, 15
        %s248 = smul.addr %s247, 8
        %s249 = scalar_lea.vmem %s1, %s248
        %s250 = smul.u32 8, %s14
      $region40: #{temporal_network_divergence.1} parent=31 // pred_fallthru
        _
    $region32: #{temporal_network_divergence.1} parent=5 // pred_fallthru
      _
    %p251 = scmp.le.s32.totalorder 1, %s14
    %p252 = scmp.lt.s32.totalorder %s14, 3
    %p253 = pnand %p251, %p252
    %p254 = pneg %p253
    // Predicated region
    $region41: #{temporal_network_divergence.1} parent=5 // pred_check
      _
    $region42: #{temporal_network_divergence.1} parent=5 // pred_check_branch
      %256 = sbr.rel (%p253) target = $region44
    $region43: #{temporal_network_divergence.1} parent=5 // pred_region
      %s257 = ssub.s32 %s14, 1
      %s258 = smul.u32 8, %s19
      %p259 = scmp.lt.s32.totalorder %s258, 15
      %s260 = scalar_select %p259, %s258, 15
      %s261 = smul.addr %s260, 8
      %s262 = scalar_lea.vmem %s0, %s261
      %p263 = pneg %p40
      %p264 = pneg %p37
      %s265 = smul.u32 8, %s19
      %p266 = scmp.lt.s32.totalorder %s265, 15
      %s267 = scalar_select %p266, %s265, 15
      %s268 = smul.addr %s267, 8
      %s269 = scalar_lea.vmem %s1, %s268
      %p270 = pneg %p66
      %p271 = pneg %p63
      %p272 = pneg %p87
      %p273 = pneg %p84
      %p274 = pneg %p108
      %p275 = pneg %p105
      %p276 = pneg %p129
      %p277 = pneg %p126
      %p278 = pneg %p150
      %p279 = pneg %p147
      %p280 = pneg %p176
      %p281 = pneg %p173
      %s282 = smul.u32 8, %s19
      %p283 = scmp.lt.s32.totalorder %s282, 15
      %s284 = scalar_select %p283, %s282, 15
      %s285 = smul.addr %s284, 8
      %s286 = scalar_lea.vmem %s6, %s285
      %p287 = pneg %p202
      %p288 = pneg %p199
      %s289 = smul.u32 8, %s19
      %p290 = scmp.lt.s32.totalorder %s289, 15
      %s291 = scalar_select %p290, %s289, 15
      %s292 = smul.addr %s291, 8
      %s293 = scalar_lea.vmem %s7, %s292
      %s294 = smul.u32 8, %s19
      %p295 = scmp.lt.s32.totalorder %s294, 15
      %s296 = scalar_select %p295, %s294, 15
      %s297 = smul.addr %s296, 8
      %s298 = scalar_lea.vmem %s0, %s297
      %s299 = smul.u32 8, %s19
      %s300 = smul.u32 8, %s19
      %p301 = scmp.lt.s32.totalorder %s300, 15
      %s302 = scalar_select %p301, %s300, 15
      %s303 = smul.addr %s302, 8
      %s304 = scalar_lea.vmem %s1, %s303
      %s305 = smul.u32 8, %s19
      %s306 = smul.u32 8, %s19
      %p307 = scmp.lt.s32.totalorder %s306, 15
      %s308 = scalar_select %p307, %s306, 15
      %s309 = smul.addr %s308, 8
      %s310 = scalar_lea.vmem %s6, %s309
      %s311 = smul.u32 8, %s19
      %s312 = smul.u32 8, %s19
      %p313 = scmp.lt.s32.totalorder %s312, 15
      %s314 = scalar_select %p313, %s312, 15
      %s315 = smul.addr %s314, 8
      %s316 = scalar_lea.vmem %s7, %s315
      %s317 = smul.u32 8, %s19
      %v318 = vld [vmem:[%s298] sm:$0xff]
      %v319 = vld [vmem:[%s298 + $0x8] sm:$0xff]
      %v320 = vld [vmem:[%s298 + $0x10] sm:$0xff]
      %v321 = vld [vmem:[%s298 + $0x18] sm:$0xff]
      %v322 = vld [vmem:[%s298 + $0x20] sm:$0xff]
      %v323 = vld [vmem:[%s298 + $0x28] sm:$0xff]
      %v324 = vld [vmem:[%s298 + $0x30] sm:$0xff]
      %v325 = vld [vmem:[%s298 + $0x38] sm:$0xff]
      %v326 = vld [vmem:[%s304] sm:$0xff]
      %v327 = vld [vmem:[%s304 + $0x8] sm:$0xff]
      %v328 = vld [vmem:[%s304 + $0x10] sm:$0xff]
      %v329 = vld [vmem:[%s304 + $0x18] sm:$0xff]
      %v330 = vld [vmem:[%s304 + $0x20] sm:$0xff]
      %v331 = vld [vmem:[%s304 + $0x28] sm:$0xff]
      %v332 = vld [vmem:[%s304 + $0x30] sm:$0xff]
      %v333 = vld [vmem:[%s304 + $0x38] sm:$0xff]
      %v334 = vld [vmem:[%s2] sm:$0xff]
      %v335 = vld [vmem:[%s2 + $0x8] sm:$0xff]
      %v336 = vld [vmem:[%s3] sm:$0x1]
      %v337 = vld [vmem:[%s4] sm:$0xff]
      %v338 = vld [vmem:[%s4 + $0x8] sm:$0xff]
      %v339 = vld [vmem:[%s4 + $0x10] sm:$0xff]
      %v340 = vld [vmem:[%s4 + $0x18] sm:$0xff]
      %v341 = vld [vmem:[%s5] sm:$0x1]
      %v342 = vadd.f32 %v318, %v326
      %v343 = vadd.f32 %v319, %v327
      %v344 = vadd.f32 %v320, %v328
      %v345 = vadd.f32 %v321, %v329
      %v346 = vadd.f32 %v322, %v330
      %v347 = vadd.f32 %v323, %v331
      %v348 = vadd.f32 %v324, %v332
      %v349 = vadd.f32 %v325, %v333
      %v351 = vlaneseq
      %v352 = vshrl.u32 %v351, 7
      %v353 = vsub.s32 0, %v352
      %v354 = vrot.slane %v336, %v353
      %vm356 = vcmask 130048
      %v358 = vsel %vm356, %v318, 0
      %v361 = vsel %vm356, %v319, 0
      %v364 = vsel %vm356, %v320, 0
      %v367 = vsel %vm356, %v321, 0
      %v370 = vsel %vm356, %v322, 0
      %v373 = vsel %vm356, %v323, 0
      %v376 = vsel %vm356, %v324, 0
      %v379 = vsel %vm356, %v325, 0
      %v382 = vsel %vm356, %v342, 0
      %v385 = vsel %vm356, %v343, 0
      %v388 = vsel %vm356, %v344, 0
      %v391 = vsel %vm356, %v345, 0
      %v394 = vsel %vm356, %v346, 0
      %v397 = vsel %vm356, %v347, 0
      %v400 = vsel %vm356, %v348, 0
      %v403 = vsel %vm356, %v349, 0
      %405 = vmatprep.subr.mxu0 0.0
      %406 = vmatpush1.msra.mxu0 %v334
      %407 = vmatprep.subr.mxu0 0.0
      %408 = vmatpush1.msra.mxu0 %v335
      %409 = vmatprep.subr.mxu0 0.0
      %410 = vmatpush1.msra.mxu0 0.0
      %411 = vmatprep.subr.mxu0 0.0
      %412 = vmatpush1.msra.mxu0 0.0
      %413 = vmatprep.subr.mxu0 0.0
      %414 = vmatpush1.msra.mxu0 0.0
      %415 = vmatprep.subr.mxu0 0.0
      %416 = vmatpush1.msra.mxu0 0.0
      %417 = vmatprep.subr.mxu0 0.0
      %418 = vmatpush1.msra.mxu0 0.0
      %419 = vmatprep.subr.mxu0 0.0
      %420 = vmatpush1.msra.mxu0 0.0
      %421 = vmatprep.subr.mxu0 0.0
      %422 = vmatpush1.msra.mxu0 0.0
      %423 = vmatprep.subr.mxu0 0.0
      %424 = vmatpush1.msra.mxu0 0.0
      %425 = vmatprep.subr.mxu0 0.0
      %426 = vmatpush1.msra.mxu0 0.0
      %427 = vmatprep.subr.mxu0 0.0
      %428 = vmatpush1.msra.mxu0 0.0
      %429 = vmatprep.subr.mxu0 0.0
      %430 = vmatpush1.msra.mxu0 0.0
      %431 = vmatprep.subr.mxu0 0.0
      %432 = vmatpush1.msra.mxu0 0.0
      %433 = vmatprep.subr.mxu0 0.0
      %434 = vmatpush1.msra.mxu0 0.0
      %435 = vmatprep.subr.mxu0 0.0
      %436 = vmatpush1.msra.mxu0 0.0
      %437 = vmatprep.subr.mxu0 0.0
      %438 = vmatpush1.msra.mxu0 0.0
      %439 = vmatprep.subr.mxu0 0.0
      %440 = vmatpush1.msra.mxu0 0.0
      %441 = vmatprep.subr.mxu0 0.0
      %442 = vmatpush1.msra.mxu0 0.0
      %443 = vmatprep.subr.mxu0 0.0
      %444 = vmatpush1.msra.mxu0 0.0
      %445 = vmatprep.subr.mxu0 0.0
      %446 = vmatpush1.msra.mxu0 0.0
      %447 = vmatprep.subr.mxu0 0.0
      %448 = vmatpush1.msra.mxu0 0.0
      %449 = vmatprep.subr.mxu0 0.0
      %450 = vmatpush1.msra.mxu0 0.0
      %451 = vmatprep.subr.mxu0 0.0
      %452 = vmatpush1.msra.mxu0 0.0
      %453 = vmatprep.subr.mxu0 0.0
      %454 = vmatpush1.msra.mxu0 0.0
      %455 = vmatprep.subr.mxu0 0.0
      %456 = vmatpush1.msra.mxu0 0.0
      %457 = vmatprep.subr.mxu0 0.0
      %458 = vmatpush1.msra.mxu0 0.0
      %459 = vmatprep.subr.mxu0 0.0
      %460 = vmatpush1.msra.mxu0 0.0
      %461 = vmatprep.subr.mxu0 0.0
      %462 = vmatpush1.msra.mxu0 0.0
      %463 = vmatprep.subr.mxu0 0.0
      %464 = vmatpush1.msra.mxu0 0.0
      %465 = vmatprep.subr.mxu0 0.0
      %466 = vmatpush1.msra.mxu0 0.0
      %467 = vmatprep.subr.mxu0 0.0
      %468 = vmatpush1.msra.mxu0 0.0
      %469 = vmatprep.mubr.f32.mxu0 0.0
      %470 = vmatmul.mubr.f32.gmra.mrb[0].mxu0 %v358
      %v471 = vpop.f32.mrb[0].mxu0
      %v472 = vadd.f32 %v354, %v471
      %v473 = vpop.f32.mrb[0].mxu0
      %474 = vmatprep.mubr.f32.mxu0 0.0
      %475 = vmatmul.mubr.f32.gmra.mrb[0].mxu0 %v361
      %v476 = vpop.f32.mrb[0].mxu0
      %v477 = vadd.f32 %v354, %v476
      %v478 = vpop.f32.mrb[0].mxu0
      %479 = vmatprep.mubr.f32.mxu0 0.0
      %480 = vmatmul.mubr.f32.gmra.mrb[0].mxu0 %v364
      %v481 = vpop.f32.mrb[0].mxu0
      %v482 = vadd.f32 %v354, %v481
      %v483 = vpop.f32.mrb[0].mxu0
      %484 = vmatprep.mubr.f32.mxu0 0.0
      %485 = vmatmul.mubr.f32.gmra.mrb[0].mxu0 %v367
      %v486 = vpop.f32.mrb[0].mxu0
      %v487 = vadd.f32 %v354, %v486
      %v488 = vpop.f32.mrb[0].mxu0
      %489 = vmatprep.mubr.f32.mxu0 0.0
      %490 = vmatmul.mubr.f32.gmra.mrb[0].mxu0 %v370
      %v491 = vpop.f32.mrb[0].mxu0
      %v492 = vadd.f32 %v354, %v491
      %v493 = vpop.f32.mrb[0].mxu0
      %494 = vmatprep.mubr.f32.mxu0 0.0
      %495 = vmatmul.mubr.f32.gmra.mrb[0].mxu0 %v373
      %v496 = vpop.f32.mrb[0].mxu0
      %v497 = vadd.f32 %v354, %v496
      %v498 = vpop.f32.mrb[0].mxu0
      %499 = vmatprep.mubr.f32.mxu0 0.0
      %500 = vmatmul.mubr.f32.gmra.mrb[0].mxu0 %v376
      %v501 = vpop.f32.mrb[0].mxu0
      %v502 = vadd.f32 %v354, %v501
      %v503 = vpop.f32.mrb[0].mxu0
      %504 = vmatprep.mubr.f32.mxu0 0.0
      %505 = vmatmul.mubr.f32.gmra.mrb[0].mxu0 %v379
      %v506 = vpop.f32.mrb[0].mxu0
      %v507 = vadd.f32 %v354, %v506
      %v508 = vpop.f32.mrb[0].mxu0
      %509 = vmatprep.mubr.f32.mxu0 0.0
      %510 = vmatmul.mubr.f32.gmra.mrb[0].mxu0 %v382
      %v511 = vpop.f32.mrb[0].mxu0
      %v512 = vadd.f32 %v354, %v511
      %v513 = vpop.f32.mrb[0].mxu0
      %514 = vmatprep.mubr.f32.mxu0 0.0
      %515 = vmatmul.mubr.f32.gmra.mrb[0].mxu0 %v385
      %v516 = vpop.f32.mrb[0].mxu0
      %v517 = vadd.f32 %v354, %v516
      %v518 = vpop.f32.mrb[0].mxu0
      %519 = vmatprep.mubr.f32.mxu0 0.0
      %520 = vmatmul.mubr.f32.gmra.mrb[0].mxu0 %v388
      %v521 = vpop.f32.mrb[0].mxu0
      %v522 = vadd.f32 %v354, %v521
      %v523 = vpop.f32.mrb[0].mxu0
      %524 = vmatprep.mubr.f32.mxu0 0.0
      %525 = vmatmul.mubr.f32.gmra.mrb[0].mxu0 %v391
      %v526 = vpop.f32.mrb[0].mxu0
      %v527 = vadd.f32 %v354, %v526
      %v528 = vpop.f32.mrb[0].mxu0
      %529 = vmatprep.mubr.f32.mxu0 0.0
      %530 = vmatmul.mubr.f32.gmra.mrb[0].mxu0 %v394
      %v531 = vpop.f32.mrb[0].mxu0
      %v532 = vadd.f32 %v354, %v531
      %v533 = vpop.f32.mrb[0].mxu0
      %534 = vmatprep.mubr.f32.mxu0 0.0
      %535 = vmatmul.mubr.f32.gmra.mrb[0].mxu0 %v397
      %v536 = vpop.f32.mrb[0].mxu0
      %v537 = vadd.f32 %v354, %v536
      %v538 = vpop.f32.mrb[0].mxu0
      %539 = vmatprep.mubr.f32.mxu0 0.0
      %540 = vmatmul.mubr.f32.gmra.mrb[0].mxu0 %v400
      %v541 = vpop.f32.mrb[0].mxu0
      %v542 = vadd.f32 %v354, %v541
      %v543 = vpop.f32.mrb[0].mxu0
      %544 = vmatprep.mubr.f32.mxu0 0.0
      %545 = vmatmul.mubr.f32.gmra.mrb[0].mxu0 %v403
      %v546 = vpop.f32.mrb[0].mxu0
      %v547 = vadd.f32 %v354, %v546
      %v548 = vpop.f32.mrb[0].mxu0
      %549 = vdwg.mxu0
      %v550 = vmul.f32 %v472, 20.0
      %v551 = vmul.f32 %v477, 20.0
      %v552 = vmul.f32 %v482, 20.0
      %v553 = vmul.f32 %v487, 20.0
      %v554 = vmul.f32 %v492, 20.0
      %v555 = vmul.f32 %v497, 20.0
      %v556 = vmul.f32 %v502, 20.0
      %v557 = vmul.f32 %v507, 20.0
      %v558 = vmul.f32 %v512, 20.0
      %v559 = vmul.f32 %v517, 20.0
      %v560 = vmul.f32 %v522, 20.0
      %v561 = vmul.f32 %v527, 20.0
      %v562 = vmul.f32 %v532, 20.0
      %v563 = vmul.f32 %v537, 20.0
      %v564 = vmul.f32 %v542, 20.0
      %v565 = vmul.f32 %v547, 20.0
      %v566 = vmin.f32 %v550, 20.0
      %v567 = vmin.f32 %v551, 20.0
      %v568 = vmin.f32 %v552, 20.0
      %v569 = vmin.f32 %v553, 20.0
      %v570 = vmin.f32 %v554, 20.0
      %v571 = vmin.f32 %v555, 20.0
      %v572 = vmin.f32 %v556, 20.0
      %v573 = vmin.f32 %v557, 20.0
      %v574 = vmin.f32 %v558, 20.0
      %v575 = vmin.f32 %v559, 20.0
      %v576 = vmin.f32 %v560, 20.0
      %v577 = vmin.f32 %v561, 20.0
      %v578 = vmin.f32 %v562, 20.0
      %v579 = vmin.f32 %v563, 20.0
      %v580 = vmin.f32 %v564, 20.0
      %v581 = vmin.f32 %v565, 20.0
      %v582 = vmul.f32 %v566, 1.442695
      %v583 = vpow.pop %v582
      %v584 = vmul.f32 %v567, 1.442695
      %v585 = vpow.pop %v584
      %v586 = vmul.f32 %v568, 1.442695
      %v587 = vpow.pop %v586
      %v588 = vmul.f32 %v569, 1.442695
      %v589 = vpow.pop %v588
      %v590 = vmul.f32 %v570, 1.442695
      %v591 = vpow.pop %v590
      %v592 = vmul.f32 %v571, 1.442695
      %v593 = vpow.pop %v592
      %v594 = vmul.f32 %v572, 1.442695
      %v595 = vpow.pop %v594
      %v596 = vmul.f32 %v573, 1.442695
      %v597 = vpow.pop %v596
      %v598 = vmul.f32 %v574, 1.442695
      %v599 = vpow.pop %v598
      %v600 = vmul.f32 %v575, 1.442695
      %v601 = vpow.pop %v600
      %v602 = vmul.f32 %v576, 1.442695
      %v603 = vpow.pop %v602
      %v604 = vmul.f32 %v577, 1.442695
      %v605 = vpow.pop %v604
      %v606 = vmul.f32 %v578, 1.442695
      %v607 = vpow.pop %v606
      %v608 = vmul.f32 %v579, 1.442695
      %v609 = vpow.pop %v608
      %v610 = vmul.f32 %v580, 1.442695
      %v611 = vpow.pop %v610
      %v612 = vmul.f32 %v581, 1.442695
      %v613 = vpow.pop %v612
      %v614 = vadd.f32 %v583, 1.0
      %v615 = vlog2.pop %v614
      %v616 = vmul.f32 %v615, 0.6931472
      %v617 = vmul.f32 -0.5, %v583
      %v618 = vadd.f32 %v617, 1.0
      %v619 = vmul.f32 %v618, %v583
      %v620 = vand.u32 2147483647, %v583
      %vm621 = vcmp.lt.f32.partialorder %v620, 0.0004427343
      %v622 = vsel %vm621, %v619, %v616
      %v623 = vadd.f32 %v585, 1.0
      %v624 = vlog2.pop %v623
      %v625 = vmul.f32 %v624, 0.6931472
      %v626 = vmul.f32 -0.5, %v585
      %v627 = vadd.f32 %v626, 1.0
      %v628 = vmul.f32 %v627, %v585
      %v629 = vand.u32 2147483647, %v585
      %vm630 = vcmp.lt.f32.partialorder %v629, 0.0004427343
      %v631 = vsel %vm630, %v628, %v625
      %v632 = vadd.f32 %v587, 1.0
      %v633 = vlog2.pop %v632
      %v634 = vmul.f32 %v633, 0.6931472
      %v635 = vmul.f32 -0.5, %v587
      %v636 = vadd.f32 %v635, 1.0
      %v637 = vmul.f32 %v636, %v587
      %v638 = vand.u32 2147483647, %v587
      %vm639 = vcmp.lt.f32.partialorder %v638, 0.0004427343
      %v640 = vsel %vm639, %v637, %v634
      %v641 = vadd.f32 %v589, 1.0
      %v642 = vlog2.pop %v641
      %v643 = vmul.f32 %v642, 0.6931472
      %v644 = vmul.f32 -0.5, %v589
      %v645 = vadd.f32 %v644, 1.0
      %v646 = vmul.f32 %v645, %v589
      %v647 = vand.u32 2147483647, %v589
      %vm648 = vcmp.lt.f32.partialorder %v647, 0.0004427343
      %v649 = vsel %vm648, %v646, %v643
      %v650 = vadd.f32 %v591, 1.0
      %v651 = vlog2.pop %v650
      %v652 = vmul.f32 %v651, 0.6931472
      %v653 = vmul.f32 -0.5, %v591
      %v654 = vadd.f32 %v653, 1.0
      %v655 = vmul.f32 %v654, %v591
      %v656 = vand.u32 2147483647, %v591
      %vm657 = vcmp.lt.f32.partialorder %v656, 0.0004427343
      %v658 = vsel %vm657, %v655, %v652
      %v659 = vadd.f32 %v593, 1.0
      %v660 = vlog2.pop %v659
      %v661 = vmul.f32 %v660, 0.6931472
      %v662 = vmul.f32 -0.5, %v593
      %v663 = vadd.f32 %v662, 1.0
      %v664 = vmul.f32 %v663, %v593
      %v665 = vand.u32 2147483647, %v593
      %vm666 = vcmp.lt.f32.partialorder %v665, 0.0004427343
      %v667 = vsel %vm666, %v664, %v661
      %v668 = vadd.f32 %v595, 1.0
      %v669 = vlog2.pop %v668
      %v670 = vmul.f32 %v669, 0.6931472
      %v671 = vmul.f32 -0.5, %v595
      %v672 = vadd.f32 %v671, 1.0
      %v673 = vmul.f32 %v672, %v595
      %v674 = vand.u32 2147483647, %v595
      %vm675 = vcmp.lt.f32.partialorder %v674, 0.0004427343
      %v676 = vsel %vm675, %v673, %v670
      %v677 = vadd.f32 %v597, 1.0
      %v678 = vlog2.pop %v677
      %v679 = vmul.f32 %v678, 0.6931472
      %v680 = vmul.f32 -0.5, %v597
      %v681 = vadd.f32 %v680, 1.0
      %v682 = vmul.f32 %v681, %v597
      %v683 = vand.u32 2147483647, %v597
      %vm684 = vcmp.lt.f32.partialorder %v683, 0.0004427343
      %v685 = vsel %vm684, %v682, %v679
      %v686 = vadd.f32 %v599, 1.0
      %v687 = vlog2.pop %v686
      %v688 = vmul.f32 %v687, 0.6931472
      %v689 = vmul.f32 -0.5, %v599
      %v690 = vadd.f32 %v689, 1.0
      %v691 = vmul.f32 %v690, %v599
      %v692 = vand.u32 2147483647, %v599
      %vm693 = vcmp.lt.f32.partialorder %v692, 0.0004427343
      %v694 = vsel %vm693, %v691, %v688
      %v695 = vadd.f32 %v601, 1.0
      %v696 = vlog2.pop %v695
      %v697 = vmul.f32 %v696, 0.6931472
      %v698 = vmul.f32 -0.5, %v601
      %v699 = vadd.f32 %v698, 1.0
      %v700 = vmul.f32 %v699, %v601
      %v701 = vand.u32 2147483647, %v601
      %vm702 = vcmp.lt.f32.partialorder %v701, 0.0004427343
      %v703 = vsel %vm702, %v700, %v697
      %v704 = vadd.f32 %v603, 1.0
      %v705 = vlog2.pop %v704
      %v706 = vmul.f32 %v705, 0.6931472
      %v707 = vmul.f32 -0.5, %v603
      %v708 = vadd.f32 %v707, 1.0
      %v709 = vmul.f32 %v708, %v603
      %v710 = vand.u32 2147483647, %v603
      %vm711 = vcmp.lt.f32.partialorder %v710, 0.0004427343
      %v712 = vsel %vm711, %v709, %v706
      %v713 = vadd.f32 %v605, 1.0
      %v714 = vlog2.pop %v713
      %v715 = vmul.f32 %v714, 0.6931472
      %v716 = vmul.f32 -0.5, %v605
      %v717 = vadd.f32 %v716, 1.0
      %v718 = vmul.f32 %v717, %v605
      %v719 = vand.u32 2147483647, %v605
      %vm720 = vcmp.lt.f32.partialorder %v719, 0.0004427343
      %v721 = vsel %vm720, %v718, %v715
      %v722 = vadd.f32 %v607, 1.0
      %v723 = vlog2.pop %v722
      %v724 = vmul.f32 %v723, 0.6931472
      %v725 = vmul.f32 -0.5, %v607
      %v726 = vadd.f32 %v725, 1.0
      %v727 = vmul.f32 %v726, %v607
      %v728 = vand.u32 2147483647, %v607
      %vm729 = vcmp.lt.f32.partialorder %v728, 0.0004427343
      %v730 = vsel %vm729, %v727, %v724
      %v731 = vadd.f32 %v609, 1.0
      %v732 = vlog2.pop %v731
      %v733 = vmul.f32 %v732, 0.6931472
      %v734 = vmul.f32 -0.5, %v609
      %v735 = vadd.f32 %v734, 1.0
      %v736 = vmul.f32 %v735, %v609
      %v737 = vand.u32 2147483647, %v609
      %vm738 = vcmp.lt.f32.partialorder %v737, 0.0004427343
      %v739 = vsel %vm738, %v736, %v733
      %v740 = vadd.f32 %v611, 1.0
      %v741 = vlog2.pop %v740
      %v742 = vmul.f32 %v741, 0.6931472
      %v743 = vmul.f32 -0.5, %v611
      %v744 = vadd.f32 %v743, 1.0
      %v745 = vmul.f32 %v744, %v611
      %v746 = vand.u32 2147483647, %v611
      %vm747 = vcmp.lt.f32.partialorder %v746, 0.0004427343
      %v748 = vsel %vm747, %v745, %v742
      %v749 = vadd.f32 %v613, 1.0
      %v750 = vlog2.pop %v749
      %v751 = vmul.f32 %v750, 0.6931472
      %v752 = vmul.f32 -0.5, %v613
      %v753 = vadd.f32 %v752, 1.0
      %v754 = vmul.f32 %v753, %v613
      %v755 = vand.u32 2147483647, %v613
      %vm756 = vcmp.lt.f32.partialorder %v755, 0.0004427343
      %v757 = vsel %vm756, %v754, %v751
      %v758 = vmul.f32 %v622, 0.05
      %v759 = vmul.f32 %v631, 0.05
      %v760 = vmul.f32 %v640, 0.05
      %v761 = vmul.f32 %v649, 0.05
      %v762 = vmul.f32 %v658, 0.05
      %v763 = vmul.f32 %v667, 0.05
      %v764 = vmul.f32 %v676, 0.05
      %v765 = vmul.f32 %v685, 0.05
      %v766 = vmul.f32 %v694, 0.05
      %v767 = vmul.f32 %v703, 0.05
      %v768 = vmul.f32 %v712, 0.05
      %v769 = vmul.f32 %v721, 0.05
      %v770 = vmul.f32 %v730, 0.05
      %v771 = vmul.f32 %v739, 0.05
      %v772 = vmul.f32 %v748, 0.05
      %v773 = vmul.f32 %v757, 0.05
      %vm774 = vcmp.gt.f32.partialorder %v550, 20.0
      %vm775 = vcmp.gt.f32.partialorder %v551, 20.0
      %vm776 = vcmp.gt.f32.partialorder %v552, 20.0
      %vm777 = vcmp.gt.f32.partialorder %v553, 20.0
      %vm778 = vcmp.gt.f32.partialorder %v554, 20.0
      %vm779 = vcmp.gt.f32.partialorder %v555, 20.0
      %vm780 = vcmp.gt.f32.partialorder %v556, 20.0
      %vm781 = vcmp.gt.f32.partialorder %v557, 20.0
      %vm782 = vcmp.gt.f32.partialorder %v558, 20.0
      %vm783 = vcmp.gt.f32.partialorder %v559, 20.0
      %vm784 = vcmp.gt.f32.partialorder %v560, 20.0
      %vm785 = vcmp.gt.f32.partialorder %v561, 20.0
      %vm786 = vcmp.gt.f32.partialorder %v562, 20.0
      %vm787 = vcmp.gt.f32.partialorder %v563, 20.0
      %vm788 = vcmp.gt.f32.partialorder %v564, 20.0
      %vm789 = vcmp.gt.f32.partialorder %v565, 20.0
      %v790 = vsel %vm774, %v472, %v758
      %v791 = vsel %vm775, %v477, %v759
      %v792 = vsel %vm776, %v482, %v760
      %v793 = vsel %vm777, %v487, %v761
      %v794 = vsel %vm778, %v492, %v762
      %v795 = vsel %vm779, %v497, %v763
      %v796 = vsel %vm780, %v502, %v764
      %v797 = vsel %vm781, %v507, %v765
      %v798 = vsel %vm782, %v512, %v766
      %v799 = vsel %vm783, %v517, %v767
      %v800 = vsel %vm784, %v522, %v768
      %v801 = vsel %vm785, %v527, %v769
      %v802 = vsel %vm786, %v532, %v770
      %v803 = vsel %vm787, %v537, %v771
      %v804 = vsel %vm788, %v542, %v772
      %v805 = vsel %vm789, %v547, %v773
      %v807 = vlaneseq
      %v808 = vshrl.u32 %v807, 7
      %v809 = vsub.s32 0, %v808
      %v810 = vrot.slane %v341, %v809
      %vm812 = vcmask 261120
      %v814 = vsel %vm812, %v790, 0
      %v817 = vsel %vm812, %v791, 0
      %v820 = vsel %vm812, %v792, 0
      %v823 = vsel %vm812, %v793, 0
      %v826 = vsel %vm812, %v794, 0
      %v829 = vsel %vm812, %v795, 0
      %v832 = vsel %vm812, %v796, 0
      %v835 = vsel %vm812, %v797, 0
      %v838 = vsel %vm812, %v798, 0
      %v841 = vsel %vm812, %v799, 0
      %v844 = vsel %vm812, %v800, 0
      %v847 = vsel %vm812, %v801, 0
      %v850 = vsel %vm812, %v802, 0
      %v853 = vsel %vm812, %v803, 0
      %v856 = vsel %vm812, %v804, 0
      %v859 = vsel %vm812, %v805, 0
      %861 = vmatprep.subr.mxu0 0.0
      %862 = vmatpush1.msra.mxu0 %v337
      %863 = vmatprep.subr.mxu0 0.0
      %864 = vmatpush1.msra.mxu0 %v338
      %865 = vmatprep.subr.mxu0 0.0
      %866 = vmatpush1.msra.mxu0 %v339
      %867 = vmatprep.subr.mxu0 0.0
      %868 = vmatpush1.msra.mxu0 %v340
      %869 = vmatprep.subr.mxu0 0.0
      %870 = vmatpush1.msra.mxu0 0.0
      %871 = vmatprep.subr.mxu0 0.0
      %872 = vmatpush1.msra.mxu0 0.0
      %873 = vmatprep.subr.mxu0 0.0
      %874 = vmatpush1.msra.mxu0 0.0
      %875 = vmatprep.subr.mxu0 0.0
      %876 = vmatpush1.msra.mxu0 0.0
      %877 = vmatprep.subr.mxu0 0.0
      %878 = vmatpush1.msra.mxu0 0.0
      %879 = vmatprep.subr.mxu0 0.0
      %880 = vmatpush1.msra.mxu0 0.0
      %881 = vmatprep.subr.mxu0 0.0
      %882 = vmatpush1.msra.mxu0 0.0
      %883 = vmatprep.subr.mxu0 0.0
      %884 = vmatpush1.msra.mxu0 0.0
      %885 = vmatprep.subr.mxu0 0.0
      %886 = vmatpush1.msra.mxu0 0.0
      %887 = vmatprep.subr.mxu0 0.0
      %888 = vmatpush1.msra.mxu0 0.0
      %889 = vmatprep.subr.mxu0 0.0
      %890 = vmatpush1.msra.mxu0 0.0
      %891 = vmatprep.subr.mxu0 0.0
      %892 = vmatpush1.msra.mxu0 0.0
      %893 = vmatprep.subr.mxu0 0.0
      %894 = vmatpush1.msra.mxu0 0.0
      %895 = vmatprep.subr.mxu0 0.0
      %896 = vmatpush1.msra.mxu0 0.0
      %897 = vmatprep.subr.mxu0 0.0
      %898 = vmatpush1.msra.mxu0 0.0
      %899 = vmatprep.subr.mxu0 0.0
      %900 = vmatpush1.msra.mxu0 0.0
      %901 = vmatprep.subr.mxu0 0.0
      %902 = vmatpush1.msra.mxu0 0.0
      %903 = vmatprep.subr.mxu0 0.0
      %904 = vmatpush1.msra.mxu0 0.0
      %905 = vmatprep.subr.mxu0 0.0
      %906 = vmatpush1.msra.mxu0 0.0
      %907 = vmatprep.subr.mxu0 0.0
      %908 = vmatpush1.msra.mxu0 0.0
      %909 = vmatprep.subr.mxu0 0.0
      %910 = vmatpush1.msra.mxu0 0.0
      %911 = vmatprep.subr.mxu0 0.0
      %912 = vmatpush1.msra.mxu0 0.0
      %913 = vmatprep.subr.mxu0 0.0
      %914 = vmatpush1.msra.mxu0 0.0
      %915 = vmatprep.subr.mxu0 0.0
      %916 = vmatpush1.msra.mxu0 0.0
      %917 = vmatprep.subr.mxu0 0.0
      %918 = vmatpush1.msra.mxu0 0.0
      %919 = vmatprep.subr.mxu0 0.0
      %920 = vmatpush1.msra.mxu0 0.0
      %921 = vmatprep.subr.mxu0 0.0
      %922 = vmatpush1.msra.mxu0 0.0
      %923 = vmatprep.subr.mxu0 0.0
      %924 = vmatpush1.msra.mxu0 0.0
      %925 = vmatprep.mubr.f32.mxu0 0.0
      %926 = vmatmul.mubr.f32.gmra.mrb[0].mxu0 %v814
      %v927 = vpop.f32.mrb[0].mxu0
      %v928 = vadd.f32 %v810, %v927
      %v929 = vpop.f32.mrb[0].mxu0
      %930 = vmatprep.mubr.f32.mxu0 0.0
      %931 = vmatmul.mubr.f32.gmra.mrb[0].mxu0 %v817
      %v932 = vpop.f32.mrb[0].mxu0
      %v933 = vadd.f32 %v810, %v932
      %v934 = vpop.f32.mrb[0].mxu0
      %935 = vmatprep.mubr.f32.mxu0 0.0
      %936 = vmatmul.mubr.f32.gmra.mrb[0].mxu0 %v820
      %v937 = vpop.f32.mrb[0].mxu0
      %v938 = vadd.f32 %v810, %v937
      %v939 = vpop.f32.mrb[0].mxu0
      %940 = vmatprep.mubr.f32.mxu0 0.0
      %941 = vmatmul.mubr.f32.gmra.mrb[0].mxu0 %v823
      %v942 = vpop.f32.mrb[0].mxu0
      %v943 = vadd.f32 %v810, %v942
      %v944 = vpop.f32.mrb[0].mxu0
      %945 = vmatprep.mubr.f32.mxu0 0.0
      %946 = vmatmul.mubr.f32.gmra.mrb[0].mxu0 %v826
      %v947 = vpop.f32.mrb[0].mxu0
      %v948 = vadd.f32 %v810, %v947
      %v949 = vpop.f32.mrb[0].mxu0
      %950 = vmatprep.mubr.f32.mxu0 0.0
      %951 = vmatmul.mubr.f32.gmra.mrb[0].mxu0 %v829
      %v952 = vpop.f32.mrb[0].mxu0
      %v953 = vadd.f32 %v810, %v952
      %v954 = vpop.f32.mrb[0].mxu0
      %955 = vmatprep.mubr.f32.mxu0 0.0
      %956 = vmatmul.mubr.f32.gmra.mrb[0].mxu0 %v832
      %v957 = vpop.f32.mrb[0].mxu0
      %v958 = vadd.f32 %v810, %v957
      %v959 = vpop.f32.mrb[0].mxu0
      %960 = vmatprep.mubr.f32.mxu0 0.0
      %961 = vmatmul.mubr.f32.gmra.mrb[0].mxu0 %v835
      %v962 = vpop.f32.mrb[0].mxu0
      %v963 = vadd.f32 %v810, %v962
      %v964 = vpop.f32.mrb[0].mxu0
      %965 = vmatprep.mubr.f32.mxu0 0.0
      %966 = vmatmul.mubr.f32.gmra.mrb[0].mxu0 %v838
      %v967 = vpop.f32.mrb[0].mxu0
      %v968 = vadd.f32 %v810, %v967
      %v969 = vpop.f32.mrb[0].mxu0
      %970 = vmatprep.mubr.f32.mxu0 0.0
      %971 = vmatmul.mubr.f32.gmra.mrb[0].mxu0 %v841
      %v972 = vpop.f32.mrb[0].mxu0
      %v973 = vadd.f32 %v810, %v972
      %v974 = vpop.f32.mrb[0].mxu0
      %975 = vmatprep.mubr.f32.mxu0 0.0
      %976 = vmatmul.mubr.f32.gmra.mrb[0].mxu0 %v844
      %v977 = vpop.f32.mrb[0].mxu0
      %v978 = vadd.f32 %v810, %v977
      %v979 = vpop.f32.mrb[0].mxu0
      %980 = vmatprep.mubr.f32.mxu0 0.0
      %981 = vmatmul.mubr.f32.gmra.mrb[0].mxu0 %v847
      %v982 = vpop.f32.mrb[0].mxu0
      %v983 = vadd.f32 %v810, %v982
      %v984 = vpop.f32.mrb[0].mxu0
      %985 = vmatprep.mubr.f32.mxu0 0.0
      %986 = vmatmul.mubr.f32.gmra.mrb[0].mxu0 %v850
      %v987 = vpop.f32.mrb[0].mxu0
      %v988 = vadd.f32 %v810, %v987
      %v989 = vpop.f32.mrb[0].mxu0
      %990 = vmatprep.mubr.f32.mxu0 0.0
      %991 = vmatmul.mubr.f32.gmra.mrb[0].mxu0 %v853
      %v992 = vpop.f32.mrb[0].mxu0
      %v993 = vadd.f32 %v810, %v992
      %v994 = vpop.f32.mrb[0].mxu0
      %995 = vmatprep.mubr.f32.mxu0 0.0
      %996 = vmatmul.mubr.f32.gmra.mrb[0].mxu0 %v856
      %v997 = vpop.f32.mrb[0].mxu0
      %v998 = vadd.f32 %v810, %v997
      %v999 = vpop.f32.mrb[0].mxu0
      %1000 = vmatprep.mubr.f32.mxu0 0.0
      %1001 = vmatmul.mubr.f32.gmra.mrb[0].mxu0 %v859
      %v1002 = vpop.f32.mrb[0].mxu0
      %v1003 = vadd.f32 %v810, %v1002
      %v1004 = vpop.f32.mrb[0].mxu0
      %1005 = vdwg.mxu0
      %v1006 = vmul.f32 %v326, %v968
      %v1007 = vmul.f32 %v327, %v973
      %v1008 = vmul.f32 %v328, %v978
      %v1009 = vmul.f32 %v329, %v983
      %v1010 = vmul.f32 %v330, %v988
      %v1011 = vmul.f32 %v331, %v993
      %v1012 = vmul.f32 %v332, %v998
      %v1013 = vmul.f32 %v333, %v1003
      %v1014 = vsel %vm356, %v1006, 0.0
      %1015 = vadd.xlane.f32.xlu0 %v1014
      %v1016 = vpop.xlane.xlu0 %1015
      %v1017 = vsel %vm356, %v1007, 0.0
      %1018 = vadd.xlane.f32.xlu0 %v1017
      %v1019 = vpop.xlane.xlu0 %1018
      %v1020 = vsel %vm356, %v1008, 0.0
      %1021 = vadd.xlane.f32.xlu0 %v1020
      %v1022 = vpop.xlane.xlu0 %1021
      %v1023 = vsel %vm356, %v1009, 0.0
      %1024 = vadd.xlane.f32.xlu0 %v1023
      %v1025 = vpop.xlane.xlu0 %1024
      %v1026 = vsel %vm356, %v1010, 0.0
      %1027 = vadd.xlane.f32.xlu0 %v1026
      %v1028 = vpop.xlane.xlu0 %1027
      %v1029 = vsel %vm356, %v1011, 0.0
      %1030 = vadd.xlane.f32.xlu0 %v1029
      %v1031 = vpop.xlane.xlu0 %1030
      %v1032 = vsel %vm356, %v1012, 0.0
      %1033 = vadd.xlane.f32.xlu0 %v1032
      %v1034 = vpop.xlane.xlu0 %1033
      %v1035 = vsel %vm356, %v1013, 0.0
      %1036 = vadd.xlane.f32.xlu0 %v1035
      %v1037 = vpop.xlane.xlu0 %1036
      %1038 = vst.msk [vmem:[%s310] sm:$0xff] %vm356, %v928
      %1039 = vst.msk [vmem:[%s310 + $0x8] sm:$0xff] %vm356, %v933
      %1040 = vst.msk [vmem:[%s310 + $0x10] sm:$0xff] %vm356, %v938
      %1041 = vst.msk [vmem:[%s310 + $0x18] sm:$0xff] %vm356, %v943
      %1042 = vst.msk [vmem:[%s310 + $0x20] sm:$0xff] %vm356, %v948
      %1043 = vst.msk [vmem:[%s310 + $0x28] sm:$0xff] %vm356, %v953
      %1044 = vst.msk [vmem:[%s310 + $0x30] sm:$0xff] %vm356, %v958
      %1045 = vst.msk [vmem:[%s310 + $0x38] sm:$0xff] %vm356, %v963
      %v1046 = vsub.f32 0.0, %v1016
      %v1047 = vsub.f32 0.0, %v1019
      %v1048 = vsub.f32 0.0, %v1022
      %v1049 = vsub.f32 0.0, %v1025
      %v1050 = vsub.f32 0.0, %v1028
      %v1051 = vsub.f32 0.0, %v1031
      %v1052 = vsub.f32 0.0, %v1034
      %v1053 = vsub.f32 0.0, %v1037
      %vm1054 = vcmask 7168
      %1055 = vst.msk [vmem:[%s316] sm:$0xff] %vm1054, %v1046
      %1056 = vst.msk [vmem:[%s316 + $0x8] sm:$0xff] %vm1054, %v1047
      %1057 = vst.msk [vmem:[%s316 + $0x10] sm:$0xff] %vm1054, %v1048
      %1058 = vst.msk [vmem:[%s316 + $0x18] sm:$0xff] %vm1054, %v1049
      %1059 = vst.msk [vmem:[%s316 + $0x20] sm:$0xff] %vm1054, %v1050
      %1060 = vst.msk [vmem:[%s316 + $0x28] sm:$0xff] %vm1054, %v1051
      %1061 = vst.msk [vmem:[%s316 + $0x30] sm:$0xff] %vm1054, %v1052
      %1062 = vst.msk [vmem:[%s316 + $0x38] sm:$0xff] %vm1054, %v1053
      %s1063 = smul.u32 8, %s19
      %p1064 = scmp.lt.s32.totalorder %s1063, 15
      %s1065 = scalar_select %p1064, %s1063, 15
      %s1066 = smul.addr %s1065, 8
      %s1067 = scalar_lea.vmem %s6, %s1066
      %s1068 = smul.u32 8, %s19
      %p1069 = scmp.lt.s32.totalorder %s1068, 15
      %s1070 = scalar_select %p1069, %s1068, 15
      %s1071 = smul.addr %s1070, 8
      %s1072 = scalar_lea.vmem %s7, %s1071
      // Predicated region
      $region45: #{temporal_network_divergence.1} parent=43 // pred_check
        %p1073 = pneg %p173
      $region46: #{temporal_network_divergence.1} parent=43 // pred_check_branch
        %1075 = sbr.rel (%p1073) target = $region48
      $region47: #{temporal_network_divergence.1} parent=43 // pred_region
        %s1076 = smul.u32 8, %s19
      $region48: #{temporal_network_divergence.1} parent=43 // pred_fallthru
        _
      // Predicated region
      $region49: #{temporal_network_divergence.1} parent=43 // pred_check
        %p1077 = pneg %p199
      $region50: #{temporal_network_divergence.1} parent=43 // pred_check_branch
        %1079 = sbr.rel (%p1077) target = $region52
      $region51: #{temporal_network_divergence.1} parent=43 // pred_region
        %s1080 = smul.u32 8, %s19
      $region52: #{temporal_network_divergence.1} parent=43 // pred_fallthru
        _
    $region44: #{temporal_network_divergence.1} parent=5 // pred_fallthru
      _
    %p1081 = scmp.le.s32.totalorder 2, %s14
    // Predicated region
    $region53: #{temporal_network_divergence.1} parent=5 // pred_check
      %p1082 = pneg %p1081
    $region54: #{temporal_network_divergence.1} parent=5 // pred_check_branch
      %1084 = sbr.rel (%p1082) target = $region56
    $region55: #{temporal_network_divergence.1} parent=5 // pred_region
      %s1085 = ssub.s32 %s14, 2
      // Predicated region
      $region57: #{temporal_network_divergence.1} parent=55 // pred_check
        %p1086 = pneg %p179
      $region58: #{temporal_network_divergence.1} parent=55 // pred_check_branch
        %1088 = sbr.rel (%p1086) target = $region60
      $region59: #{temporal_network_divergence.1} parent=55 // pred_region
        %s1089 = smul.u32 8, %s20
        %p1090 = scmp.lt.s32.totalorder %s1089, 15
        %s1091 = scalar_select %p1090, %s1089, 15
        %s1092 = smul.addr %s1091, 8
        %s1093 = scalar_lea.vmem %s6, %s1092
      $region60: #{temporal_network_divergence.1} parent=55 // pred_fallthru
        _
      // Predicated region
      $region61: #{temporal_network_divergence.1} parent=55 // pred_check
        %p1094 = pneg %p205
      $region62: #{temporal_network_divergence.1} parent=55 // pred_check_branch
        %1096 = sbr.rel (%p1094) target = $region64
      $region63: #{temporal_network_divergence.1} parent=55 // pred_region
        %s1097 = smul.u32 8, %s20
        %p1098 = scmp.lt.s32.totalorder %s1097, 15
        %s1099 = scalar_select %p1098, %s1097, 15
        %s1100 = smul.addr %s1099, 8
        %s1101 = scalar_lea.vmem %s7, %s1100
      $region64: #{temporal_network_divergence.1} parent=55 // pred_fallthru
        _
    $region56: #{temporal_network_divergence.1} parent=5 // pred_fallthru
      _
  $region6: #{temporal_network_divergence.1} parent=0 // loop_footer
    %s18 = sadd.s32 1, %s14
  $region7: #{temporal_network_divergence.1} parent=0 // loop_footer_branch
    %13 = sbr.rel target = $region3
  $region8: #{temporal_network_divergence.1} parent=0 // loop_exit
    _

</llo_original>
